<compile_context>
chip_gen: v5e
topology: v5e:2x2
jax: 0.10.0
libtpu: 0.0.40
codegen_flags: <defaults>
</compile_context>

<pallas_src>
import math

import jax
import jax.numpy as jnp
from jax.experimental import pallas as pl
from jax.experimental.pallas import tpu as pltpu


def _scale_kernel(mean_ref, x_ref, o_ref):
    # mean_ref: (1, 1) f32 scalar in SMEM; x_ref/o_ref: (block_rows, lanes).
    scale = mean_ref[0, 0]
    x = x_ref[...]
    o_ref[...] = (x * scale.astype(x.dtype)).astype(o_ref.dtype)


def param_forward(weight: jax.Array, inp: jax.Array,
                  *, target_block_bytes: int = 2 << 20) -> jax.Array:
    """Computes weight.mean() * inp with the elementwise hot path in Pallas."""
    orig_shape = inp.shape
    dtype = inp.dtype
    n = math.prod(orig_shape)

    # Hoisted reduction: mean of the parameter, kept in f32.
    mean_f32 = jnp.sum(weight.astype(jnp.float32)) / weight.shape[0]
    mean2d = mean_f32.reshape(1, 1)

    # TODO(synk): integer inputs keep the input dtype here, whereas PyTorch
    # promotes float-scalar * int-tensor to float.

    flat = inp.reshape(-1)

    # Split off a tiny (<128 elem) unaligned tail so the main slab needs no
    # padding copy; the aligned case (e.g. NCHW with H*W % 128 == 0) is a
    # pure reshape.
    main_n = (n // 128) * 128
    tail_n = n - main_n

    if main_n == 0:
        out = flat * mean_f32.astype(dtype)
        return out.reshape(orig_shape)

    main = flat[:main_n] if tail_n else flat

    # Widest lane dimension (multiple of 128) that divides the main slab.
    lanes = 128
    for cand in (1024, 512, 256):
        if main_n % cand == 0:
            lanes = cand
            break
    rows = main_n // lanes

    dsize = jnp.dtype(dtype).itemsize
    # ~2 MiB input block per grid step, rounded down to a multiple of 8 rows.
    target_rows = max(8, (target_block_bytes // (lanes * dsize)) // 8 * 8)
    if rows <= target_rows:
        block_rows = rows          # single full-array block (grid = 1)
        grid = (1,)
    else:
        block_rows = target_rows   # multiple of 8; uneven last block is OK
        grid = (pl.cdiv(rows, block_rows),)

    x2d = main.reshape(rows, lanes)

    out2d = pl.pallas_call(
        _scale_kernel,
        out_shape=jax.ShapeDtypeStruct((rows, lanes), dtype),
        grid_spec=pltpu.PrefetchScalarGridSpec(
            num_scalar_prefetch=0,
            grid=grid,
            in_specs=[
                # precomputed mean: scalar resident in SMEM, no tiling
                pl.BlockSpec(memory_space=pltpu.MemorySpace.SMEM),
                # input: large lane-dense row blocks
                pl.BlockSpec((block_rows, lanes), lambda i: (i, 0)),
            ],
            out_specs=pl.BlockSpec((block_rows, lanes), lambda i: (i, 0)),
        ),
        compiler_params=pltpu.CompilerParams(
            dimension_semantics=("parallel",)),
        cost_estimate=pl.CostEstimate(
            flops=main_n,
            transcendentals=0,
            bytes_accessed=2 * main_n * dsize),
    )(mean2d, x2d)

    main_out = out2d.reshape(-1)
    if tail_n:
        tail_out = flat[main_n:] * mean_f32.astype(dtype)
        main_out = jnp.concatenate([main_out, tail_out])
    return main_out.reshape(orig_shape)


if __name__ == "__main__":
    key = jax.random.PRNGKey(0)
    kw, kx = jax.random.split(key)

    # Param(size) with size=32
    weight = jax.random.normal(kw, (32,), dtype=jnp.float32)

    # Small NCHW-style input: batch=2, channels=4, spatial=16x16
    x = jax.random.normal(kx, (2, 4, 16, 16), dtype=jnp.float32)

    out = param_forward(weight, x)
    out = jax.block_until_ready(out)

    # Reference check (pure JAX)
    ref = jnp.mean(weight) * x
    assert out.shape == x.shape and out.dtype == x.dtype
    assert jnp.allclose(out, ref, atol=1e-5, rtol=1e-5)

    print("KERNEL_OK")
</pallas_src>

<mosaic_0001>
module attributes {stable_mosaic.version = 11 : i64} {
  func.func @_scale_kernel(%arg0: i32, %arg1: memref<1x1xf32, #tpu.memory_space<smem>>, %arg2: memref<2x1024xf32, #tpu.memory_space<vmem>>, %arg3: memref<2x1024xf32, #tpu.memory_space<vmem>>) attributes {dimension_semantics = [#tpu.dimension_semantics<parallel>], iteration_bounds = array<i64: 1>, scalar_prefetch = 0 : i64, scratch_operands = 0 : i64, tpu.core_type = #tpu.core_type<tc>, window_params = [{transform_indices = @transform_0, window_bounds = array<i64: 1, 1>}, {transform_indices = @transform_1, window_bounds = array<i64: 2, 1024>}, {transform_indices = @transform_2, window_bounds = array<i64: 2, 1024>}]} {
    %c0 = arith.constant 0 : index
    %c0_0 = arith.constant 0 : index
    %0 = memref.load %arg1[%c0, %c0_0] : memref<1x1xf32, #tpu.memory_space<smem>>
    %c0_1 = arith.constant 0 : index
    %c0_2 = arith.constant 0 : index
    %1 = vector.load %arg2[%c0_1, %c0_2] : memref<2x1024xf32, #tpu.memory_space<vmem>>, vector<2x1024xf32>
    %2 = vector.broadcast %0 : f32 to vector<2x1024xf32>
    %3 = arith.mulf %1, %2 : vector<2x1024xf32>
    %c0_3 = arith.constant 0 : index
    %c0_4 = arith.constant 0 : index
    %4 = vector.load %arg3[%c0_3, %c0_4] : memref<2x1024xf32, #tpu.memory_space<vmem>>, vector<2x1024xf32>
    tpu.vector_store %arg3[%c0_3, %c0_4], %3 {strides = array<i32>} : memref<2x1024xf32, #tpu.memory_space<vmem>>, vector<2x1024xf32>,
    return
  }
  func.func @transform_0(%arg0: i32) -> (i32, i32) {
    %c0_i32 = arith.constant 0 : i32
    %c0_i32_0 = arith.constant 0 : i32
    %c0_i32_1 = arith.constant 0 : i32
    return %c0_i32, %c0_i32_0 : i32, i32
  }
  func.func @transform_1(%arg0: i32) -> (i32, i32) {
    %c0_i32 = arith.constant 0 : i32
    %c0_i32_0 = arith.constant 0 : i32
    return %arg0, %c0_i32 : i32, i32
  }
  func.func @transform_2(%arg0: i32) -> (i32, i32) {
    %c0_i32 = arith.constant 0 : i32
    %c0_i32_0 = arith.constant 0 : i32
    return %arg0, %c0_i32 : i32, i32
  }
}

</mosaic_0001>

<llo_original>
// kernel: tpu_custom_call.1
$region0: #{tpu_custom_call.1}
  #allocation0 [shape = 'u32[]', space=smem, size = 0x4, offset = 0x4, fixed_abs, tag = 'smem constant byte address 0x4 - core index']
  #allocation1 [shape = 'u32[72,128]{1,0:T(1,128)}', space=vmem, size = 0x9000, scoped, tag = 'internal scratch']
  #allocation2 [shape = 'f32[1,1]{1,0:T(1,128)S(6)}', space=smem, size = 0x200, scoped, tag = 'scoped memory for tpu_custom_call.1']
  %s0 = inlined_call_operand.<no memory space> [shape: f32[1,1], index: 0, kind: input, shape index: {}]
  %s1 = inlined_call_operand.hbm [shape: f32[2,1024], index: 1, kind: input, shape index: {}]
  %s2 = inlined_call_operand.hbm [shape: f32[2,1024], index: 2, kind: output, shape index: {}]
  %s3 = sld [smem:[#allocation0]]
  $region22: #{tpu_custom_call.1} parent=0
    _
  %s5 = ssub.s32 1, %s3
  %s6 = scalar_select 0, %s5, %s3
  %7 = sst [smem:[#allocation2]] %s0
  $region1: #{tpu_custom_call.1} parent=0
    #allocation3 [shape = 'u8[8192]{0}', space=vmem, size = 0x2000, scoped, tag = 'input window, operand 1, single buffered']
    #allocation4 [shape = 's32[1]{0}', space=sflag, size = 0x4, scoped, tag = 'scoped memory for tpu_custom_call.1']
    #allocation5 [shape = 's32[1]{0}', space=sflag, size = 0x4, scoped, tag = 'scoped memory for tpu_custom_call.1']
    #allocation6 [shape = 'u8[8192]{0}', space=vmem, size = 0x2000, scoped, tag = 'output window, operand 0, single buffered']
    %8 = vsyncpa [#allocation4], 0
    %9 = vsyncpa [#allocation5], 0
    // Predicated region
    $region2: #{tpu_custom_call.1} parent=1 // pred_check
      _
    $region3: #{tpu_custom_call.1} parent=1 // pred_check_branch
      %11 = sbr.rel (0) target = $region5
    $region4: #{tpu_custom_call.1} parent=1 // pred_region
      _
    $region5: #{tpu_custom_call.1} parent=1 // pred_fallthru
      _
    // Predicated region
    $region6: #{tpu_custom_call.1} parent=1 // pred_check
      _
    $region7: #{tpu_custom_call.1} parent=1 // pred_check_branch
      %13 = sbr.rel (0) target = $region9
    $region8: #{tpu_custom_call.1} parent=1 // pred_region
      %15 = vsyncadd [#allocation4], 0
      %s17 = sshll.u32 %s1, 4
      %s18 = int_to_ptr.hbm [resolvable:$true] %s17
      %s19 = sshll.u32 [#allocation3], 4
      %s20 = int_to_ptr.vmem [resolvable:$true] %s19
      %22 = dma.hbm_to_vmem [thread:$0]  %s18, 256, %s20, [#allocation4]
    $region9: #{tpu_custom_call.1} parent=1 // pred_fallthru
      _
    // Predicated region
    $region10: #{tpu_custom_call.1} parent=1 // pred_check
      _
    $region11: #{tpu_custom_call.1} parent=1 // pred_check_branch
      %24 = sbr.rel (0) target = $region13
    $region12: #{tpu_custom_call.1} parent=1 // pred_region
      %26 = dma.done [#allocation4], 256
    $region13: #{tpu_custom_call.1} parent=1 // pred_fallthru
      _
    %s27 = sld [smem:[#allocation2]]
    %v28 = vld [vmem:[#allocation3] sm:$0xff]
    %v29 = vld [vmem:[#allocation3 + $0x8] sm:$0xff]
    %v30 = vstv %s27
    %v31 = vmul.f32 %v28, %v30
    %v32 = vmul.f32 %v29, %v30
    %33 = vst [vmem:[#allocation6] sm:$0xff] %v31
    %34 = vst [vmem:[#allocation6 + $0x8] sm:$0xff] %v32
    // Predicated region
    $region14: #{tpu_custom_call.1} parent=1 // pred_check
      _
    $region15: #{tpu_custom_call.1} parent=1 // pred_check_branch
      %36 = sbr.rel (0) target = $region17
    $region16: #{tpu_custom_call.1} parent=1 // pred_region
      %38 = vsyncadd [#allocation5], 0
      %s40 = sshll.u32 [#allocation6], 4
      %s41 = int_to_ptr.vmem [resolvable:$true] %s40
      %s42 = sshll.u32 %s2, 4
      %s43 = int_to_ptr.hbm [resolvable:$true] %s42
      %45 = dma.vmem_to_hbm [thread:$0]  %s41, 256, %s43, [#allocation5]
    $region17: #{tpu_custom_call.1} parent=1 // pred_fallthru
      _
    // Predicated region
    $region18: #{tpu_custom_call.1} parent=1 // pred_check
      _
    $region19: #{tpu_custom_call.1} parent=1 // pred_check_branch
      %47 = sbr.rel (0) target = $region21
    $region20: #{tpu_custom_call.1} parent=1 // pred_region
      %49 = dma.done [#allocation5], 256
    $region21: #{tpu_custom_call.1} parent=1 // pred_fallthru
      _
    %50 = vsyncpa [#allocation4], 1
    %51 = vsyncpa [#allocation5], 1

</llo_original>
